<compile_context>
chip_gen: v7x
topology: tpu7x:2x2x1
jax: 0.10.0
libtpu: 0.0.40
codegen_flags: <defaults>
</compile_context>

<pallas_src>
import functools
import math

import jax
import jax.numpy as jnp
from jax.experimental import pallas as pl
from jax.experimental.pallas import tpu as pltpu


_BLOCK_BYTES = 4 * 1024 * 1024       # target bytes per block (~4 MiB)
_MAX_COL_TILE = 2048                 # lanes per block (multiple of 128)
_VMEM_LIMIT = 40 * 1024 * 1024       # explicit; 2x in + 2x out blocks ~= 16 MiB
_JNP_FALLBACK_ELEMS = 1024           # tiny inputs: plain jnp (launch overhead dominates)


# ---------------------------------------------------------------------------
# kernels
# ---------------------------------------------------------------------------

def _elem_kernel(x_ref, o_ref, *, acti_type):
    # compute in f32 (free when mem-bound; avoids bf16 VPU/EUP issues on v5e)
    x = x_ref[...].astype(jnp.float32)
    if acti_type == "relu":
        y = jnp.maximum(x, 0.0)
    elif acti_type == "leakyrelu":
        y = jnp.where(x >= 0, x, 0.1 * x)            # negative_slope = 0.1 (per module)
    elif acti_type == "elu":
        # ELU(alpha=1): x if x > 0 else expm1(x)  (clamp unselected branch)
        y = jnp.where(x > 0, x, jnp.expm1(jnp.minimum(x, 0.0)))
    else:
        raise ValueError(f"unknown acti_type: {acti_type}")
    o_ref[...] = y.astype(o_ref.dtype)


def _prelu_kernel(x_ref, alpha_ref, o_ref):
    x = x_ref[...].astype(jnp.float32)
    a = alpha_ref[...].astype(jnp.float32)           # (row_tile, 1) -> lane broadcast
    o_ref[...] = jnp.where(x >= 0, x, a * x).astype(o_ref.dtype)


# ---------------------------------------------------------------------------
# tiling helpers (no padding: free 2-D views + Pallas ragged-edge clipping)
# ---------------------------------------------------------------------------

def _sublane_multiple(itemsize):
    # sub-32-bit dtypes pack along sublanes: f32 -> 8, bf16 -> 16, int8/fp8 -> 32
    return 8 * max(1, 4 // itemsize)


def _free_2d_view(shape):
    """A (rows, cols) factorization of `shape` reachable by a free reshape."""
    total = math.prod(shape)
    # Prefer a lane-aligned factorization (cols a multiple of 128).
    for cols in (2048, 1024, 512, 256, 128):
        if total % cols == 0:
            return total // cols, cols
    # Fall back to collapsing trailing dims until lane-dense enough; the ragged
    # last column block is clipped by Pallas (no wrapper pad/slice passes).
    cols, i = 1, len(shape)
    while i > 0 and cols < 128:
        i -= 1
        cols *= shape[i]
    return total // cols, cols


def _pick_tiles(rows, cols, itemsize):
    col_tile = cols if cols <= _MAX_COL_TILE else _MAX_COL_TILE
    sub = _sublane_multiple(itemsize)
    rt = (_BLOCK_BYTES // (col_tile * itemsize)) // sub * sub
    rt = max(rt, sub)
    row_tile = rows if rt >= rows else rt            # full-dim escape for small rows
    return row_tile, col_tile


# ---------------------------------------------------------------------------
# wrappers
# ---------------------------------------------------------------------------

def _acti_jnp(x, acti_type, prelu_weight):
    """Plain-jnp path for tiny tensors (also serves as the reference)."""
    if acti_type == "relu":
        return jnp.maximum(x, 0.0)
    if acti_type == "leakyrelu":
        return jnp.where(x >= 0, x, 0.1 * x)
    if acti_type == "elu":
        return jnp.where(x > 0, x, jnp.expm1(jnp.minimum(x, 0.0)))
    if acti_type == "prelu":
        C = x.shape[1]
        a = jnp.asarray(prelu_weight, x.dtype).reshape(-1)
        if a.shape[0] == 1:
            a = jnp.broadcast_to(a, (C,))
        a = a.reshape((1, C) + (1,) * (x.ndim - 2))
        return jnp.where(x >= 0, x, a * x)
    raise ValueError(f"unknown acti_type: {acti_type}")


def _acti_elementwise(x, acti_type):
    """relu / leakyrelu / elu: lane-dense free-view slab, ragged edges clipped."""
    rows, cols = _free_2d_view(x.shape)
    x2 = x.reshape(rows, cols)                       # free view, no pad
    row_tile, col_tile = _pick_tiles(rows, cols, x.dtype.itemsize)
    grid = (pl.cdiv(rows, row_tile), pl.cdiv(cols, col_tile))

    kernel = functools.partial(_elem_kernel, acti_type=acti_type)
    out2 = pl.pallas_call(
        kernel,
        out_shape=jax.ShapeDtypeStruct((rows, cols), x.dtype),
        grid_spec=pl.GridSpec(
            grid=grid,
            in_specs=[pl.BlockSpec((row_tile, col_tile), lambda i, j: (i, j))],
            out_specs=pl.BlockSpec((row_tile, col_tile), lambda i, j: (i, j)),
        ),
        compiler_params=pltpu.CompilerParams(
            dimension_semantics=("parallel", "parallel"),
            vmem_limit_bytes=_VMEM_LIMIT,
        ),
    )(x2)
    return out2.reshape(x.shape)                     # free view, no slice


def _acti_prelu(x, prelu_weight):
    """PReLU with per-channel (or single) alpha; channel is dim 1 (NCHW-style)."""
    shape = x.shape
    N, C = shape[0], shape[1]
    rows = N * C
    cols = math.prod(shape[2:]) if len(shape) > 2 else 1
    x2 = x.reshape(rows, cols)                       # free view, no pad

    w = jnp.asarray(prelu_weight, dtype=x.dtype).reshape(-1)
    if w.shape[0] == 1:                              # nn.PReLU default num_parameters=1
        w = jnp.broadcast_to(w, (C,))
    alpha_rows = jnp.tile(w, (N,)).reshape(rows, 1)  # one alpha per (n, c) row (tiny)

    row_tile, col_tile = _pick_tiles(rows, cols, x.dtype.itemsize)
    grid = (pl.cdiv(rows, row_tile), pl.cdiv(cols, col_tile))

    out2 = pl.pallas_call(
        _prelu_kernel,
        out_shape=jax.ShapeDtypeStruct((rows, cols), x.dtype),
        grid_spec=pl.GridSpec(
            grid=grid,
            in_specs=[
                pl.BlockSpec((row_tile, col_tile), lambda i, j: (i, j)),
                pl.BlockSpec((row_tile, 1), lambda i, j: (i, 0)),   # resident over j
            ],
            out_specs=pl.BlockSpec((row_tile, col_tile), lambda i, j: (i, j)),
        ),
        compiler_params=pltpu.CompilerParams(
            # no carried state -> both axes parallel (v7x dual-TC sharding)
            dimension_semantics=("parallel", "parallel"),
            vmem_limit_bytes=_VMEM_LIMIT,
        ),
    )(x2, alpha_rows)
    return out2.reshape(shape)                       # free view, no slice


def acti_switch(x, acti_type: str, prelu_weight=None):
    """ActiSwitch forward: relu / prelu / leakyrelu(0.1) / elu."""
    acti_type = acti_type.lower()
    if acti_type not in ("relu", "prelu", "leakyrelu", "elu"):
        raise ValueError(f"unknown acti_type: {acti_type}")
    if acti_type == "prelu" and prelu_weight is None:
        # nn.PReLU default: num_parameters=1, init=0.25
        prelu_weight = jnp.full((1,), 0.25, dtype=x.dtype)
    if x.size <= _JNP_FALLBACK_ELEMS:
        return _acti_jnp(x, acti_type, prelu_weight)
    if acti_type == "prelu":
        return _acti_prelu(x, prelu_weight)
    return _acti_elementwise(x, acti_type)


# ---------------------------------------------------------------------------
# reference + test
# ---------------------------------------------------------------------------

def _reference(x, acti_type, prelu_weight):
    return _acti_jnp(x, acti_type.lower(), prelu_weight)


if __name__ == "__main__":
    key = jax.random.PRNGKey(0)
    ok = True

    # shapes: aligned spatial; non-128-multiple spatial; ragged multi-block cols;
    # tiny shape (jnp fallback path)
    shapes = ((2, 4, 16, 16), (2, 8, 14, 14), (2, 3, 130, 50), (1, 4, 8, 8))
    for shape in shapes:
        key, sub = jax.random.split(key)
        x = jax.random.normal(sub, shape, dtype=jnp.float32)
        C = shape[1]
        prelu_w_full = jnp.full((C,), 0.25, dtype=jnp.float32)   # nn.PReLU(channel_num)
        prelu_w_one = jnp.full((1,), 0.25, dtype=jnp.float32)    # nn.PReLU() default

        cases = [
            ("relu", None),
            ("leakyrelu", None),
            ("elu", None),
            ("prelu", prelu_w_full),
            ("prelu", prelu_w_one),
        ]
        for acti, w in cases:
            out = acti_switch(x, acti, prelu_weight=w)
            out = jax.block_until_ready(out)
            ref = _reference(x, acti, w)
            if not jnp.allclose(out, ref, atol=1e-6, rtol=1e-6):
                ok = False
                print(f"MISMATCH for {acti} at shape {shape}")

    if ok:
        print("KERNEL_OK")
</pallas_src>

<mosaic_0001>
module attributes {stable_mosaic.version = 11 : i64} {
  func.func @_elem_kernel(%arg0: i32, %arg1: i32, %arg2: memref<1x2048xf32, #tpu.memory_space<vmem>>, %arg3: memref<1x2048xf32, #tpu.memory_space<vmem>>) attributes {dimension_semantics = [#tpu.dimension_semantics<parallel>, #tpu.dimension_semantics<parallel>], iteration_bounds = array<i64: 1, 1>, scalar_prefetch = 0 : i64, scratch_operands = 0 : i64, tpu.core_type = #tpu.core_type<tc>, window_params = [{transform_indices = @transform_0, window_bounds = array<i64: 1, 2048>}, {transform_indices = @transform_1, window_bounds = array<i64: 1, 2048>}]} {
    %c0 = arith.constant 0 : index
    %c0_0 = arith.constant 0 : index
    %0 = vector.load %arg2[%c0, %c0_0] : memref<1x2048xf32, #tpu.memory_space<vmem>>, vector<1x2048xf32>
    %cst = arith.constant 0.000000e+00 : f32
    %1 = vector.broadcast %cst : f32 to vector<1x2048xf32>
    %2 = arith.maximumf %0, %1 : vector<1x2048xf32>
    %c0_1 = arith.constant 0 : index
    %c0_2 = arith.constant 0 : index
    %3 = vector.load %arg3[%c0_1, %c0_2] : memref<1x2048xf32, #tpu.memory_space<vmem>>, vector<1x2048xf32>
    tpu.vector_store %arg3[%c0_1, %c0_2], %2 {strides = array<i32>} : memref<1x2048xf32, #tpu.memory_space<vmem>>, vector<1x2048xf32>,
    return
  }
  func.func @transform_0(%arg0: i32, %arg1: i32) -> (i32, i32) {
    %c0_i32 = arith.constant 0 : i32
    return %arg0, %arg1 : i32, i32
  }
  func.func @transform_1(%arg0: i32, %arg1: i32) -> (i32, i32) {
    %c0_i32 = arith.constant 0 : i32
    return %arg0, %arg1 : i32, i32
  }
}

</mosaic_0001>

<llo_original>
// kernel: tpu_custom_call.1
$region0: #{tpu_custom_call.1}
  #allocation0 [shape = 'u32[]', space=smem, size = 0x4, offset = 0x4, fixed_abs, tag = 'smem constant byte address 0x4 - core index']
  #allocation1 [shape = 'u32[144,128]{1,0:T(1,128)}', space=vmem, size = 0x12000, scoped, tag = 'internal scratch']
  %s0 = inlined_call_operand.hbm [shape: f32[1,2048], index: 0, kind: input, shape index: {}]
  %s1 = inlined_call_operand.hbm [shape: f32[1,2048], index: 1, kind: output, shape index: {}]
  %s2 = sld [smem:[#allocation0]]
  $region18: #{tpu_custom_call.1} parent=0
    _
  %s4 = ssub.s32 1, %s2
  %s5 = scalar_select 0, %s4, %s2
  $region1: #{tpu_custom_call.1} parent=0
    #allocation2 [shape = 'u8[8192]{0}', space=vmem, size = 0x2000, scoped, tag = 'input window, operand 0, single buffered']
    #allocation3 [shape = 's32[1]{0}', space=sflag, size = 0x4, scoped, tag = 'scoped memory for tpu_custom_call.1']
    #allocation4 [shape = 's32[1]{0}', space=sflag, size = 0x4, scoped, tag = 'scoped memory for tpu_custom_call.1']
    #allocation5 [shape = 'u8[8192]{0}', space=vmem, size = 0x2000, scoped, tag = 'output window, operand 0, single buffered']
    %6 = vsyncpa [#allocation3], 0
    %7 = vsyncpa [#allocation4], 0
    // Predicated region
    $region2: #{tpu_custom_call.1} parent=1 // pred_check
      _
    $region3: #{tpu_custom_call.1} parent=1 // pred_check_branch
      %9 = sbr.rel (0) target = $region5
    $region4: #{tpu_custom_call.1} parent=1 // pred_region
      %s11 = ssub.s32 256, 256
      %12 = vsyncadd [#allocation3], %s11
      %s14 = sshll.u32 [#allocation2], 4
      %s15 = int_to_ptr.vmem [resolvable:$true] %s14
      %17 = dma.hbm_to_vmem [thread:$0]  %s0, 256, %s15, [#allocation3]
    $region5: #{tpu_custom_call.1} parent=1 // pred_fallthru
      _
    // Predicated region
    $region6: #{tpu_custom_call.1} parent=1 // pred_check
      _
    $region7: #{tpu_custom_call.1} parent=1 // pred_check_branch
      %19 = sbr.rel (0) target = $region9
    $region8: #{tpu_custom_call.1} parent=1 // pred_region
      %20 = dma.done [#allocation3], 256
    $region9: #{tpu_custom_call.1} parent=1 // pred_fallthru
      _
    %v21 = vld [vmem:[#allocation2] sm:$0xff]
    %v22 = vld [vmem:[#allocation2 + $0x8] sm:$0xff]
    %v23 = vmax.f32 %v21, 0.0
    %v24 = vmax.f32 %v22, 0.0
    %25 = vst [vmem:[#allocation5] sm:$0xff] %v23
    %26 = vst [vmem:[#allocation5 + $0x8] sm:$0xff] %v24
    // Predicated region
    $region10: #{tpu_custom_call.1} parent=1 // pred_check
      _
    $region11: #{tpu_custom_call.1} parent=1 // pred_check_branch
      %28 = sbr.rel (0) target = $region13
    $region12: #{tpu_custom_call.1} parent=1 // pred_region
      %s30 = ssub.s32 256, 256
      %31 = vsyncadd [#allocation4], %s30
      %s33 = sshll.u32 [#allocation5], 4
      %s34 = int_to_ptr.vmem [resolvable:$true] %s33
      %36 = dma.vmem_to_hbm [thread:$0]  %s34, 256, %s1, [#allocation4]
    $region13: #{tpu_custom_call.1} parent=1 // pred_fallthru
      _
    // Predicated region
    $region14: #{tpu_custom_call.1} parent=1 // pred_check
      _
    $region15: #{tpu_custom_call.1} parent=1 // pred_check_branch
      %38 = sbr.rel (0) target = $region17
    $region16: #{tpu_custom_call.1} parent=1 // pred_region
      %39 = dma.done [#allocation4], 256
    $region17: #{tpu_custom_call.1} parent=1 // pred_fallthru
      _
    %40 = vsyncpa [#allocation3], 1
    %41 = vsyncpa [#allocation4], 1

</llo_original>
